<compile_context>
chip_gen: v6e
topology: v6e:2x2x1
jax: 0.10.0
libtpu: 0.0.40
codegen_flags: <defaults>
</compile_context>

<pallas_src>
import jax
import jax.numpy as jnp
import numpy as np
from jax.experimental import pallas as pl
from jax.experimental.pallas import tpu as pltpu

_LANES = 128
_MAX_BLOCK_BYTES = 1 << 20        # ~1 MiB per stream block (2048 f32 rows)
_GATHER_MIN_BYTES = 128 * 1024    # per-sample size above which the DMA-gather
                                  # path beats XLA pre-gather (step overhead
                                  # vs. 2 extra HBM passes crossover)


def _cdiv(a, b):
    return -(-a // b)


def _round_up(a, m):
    return _cdiv(a, m) * m


def _to_lane_rows(a: jax.Array):
    """View `a` as (B, rows0, 128).  Free (pure reshape) when F % 128 == 0."""
    B = a.shape[0]
    F = int(np.prod(a.shape[1:])) if a.ndim > 1 else 1
    rows0 = max(1, _cdiv(F, _LANES))
    flat = a.reshape(B, F)
    lane_pad = rows0 * _LANES - F
    if lane_pad:
        flat = jnp.pad(flat, ((0, 0), (0, lane_pad)))
    return flat.reshape(B, rows0, _LANES), rows0, F


def _vmem_limit(block_bytes: int) -> int:
    # 3 streams (a, a_perm, out), double-buffered, plus slack.
    need = int(1.25 * 3 * 2 * block_bytes) + (1 << 20)
    return min(32 << 20, max(16 << 20, need))


def _cost(n_elems: int, itemsize: int) -> pl.CostEstimate:
    return pl.CostEstimate(flops=int(3 * n_elems),
                           transcendentals=0,
                           bytes_accessed=int(3 * n_elems * itemsize))


# ----------------------------------------------------------------------------
# Kernels
# ----------------------------------------------------------------------------

def _blend_gather_kernel(lam_ref, perm_ref, a_ref, ap_ref, o_ref):
    # lam_ref  : SMEM (1,) f32 scalar-prefetch
    # perm_ref : SMEM (B,) i32 scalar-prefetch (consumed by the index_maps)
    # a_ref    : VMEM (1, blk, 128) block of `a` for batch row b, chunk c
    # ap_ref   : VMEM (1, blk, 128) block of `a` for batch row perm[b], chunk c
    del perm_ref
    lam = lam_ref[0]
    o_ref[...] = (a_ref[...].astype(jnp.float32) * lam
                  + ap_ref[...].astype(jnp.float32) * (1.0 - lam)
                  ).astype(o_ref.dtype)


def _blend_flat_kernel(lam_ref, a_ref, ap_ref, o_ref):
    # a_ref / ap_ref : VMEM (blk, 128) blocks of the flattened identity /
    #                  pre-permuted streams.
    lam = lam_ref[0]
    o_ref[...] = (a_ref[...].astype(jnp.float32) * lam
                  + ap_ref[...].astype(jnp.float32) * (1.0 - lam)
                  ).astype(o_ref.dtype)


# ----------------------------------------------------------------------------
# Strategy wrappers
# ----------------------------------------------------------------------------

def _blend_gather(a: jax.Array, lam: jax.Array, perm: jax.Array) -> jax.Array:
    """Large per-sample features: gather a[perm] in the DMA via index_map."""
    B = a.shape[0]
    a3, rows0, F = _to_lane_rows(a)
    itemsize = jnp.dtype(a.dtype).itemsize
    rows_cap = max(8, _MAX_BLOCK_BYTES // (_LANES * itemsize))

    if rows0 <= rows_cap:
        # Single chunk: block rows == full array dim, no sublane padding.
        blk, n_chunks, rows = rows0, 1, rows0
    else:
        n_chunks = _cdiv(rows0, rows_cap)
        blk = _round_up(_cdiv(rows0, n_chunks), 8)     # <= rows_cap
        rows = n_chunks * blk                          # pads <= ~8*n_chunks rows
    if rows != rows0:
        a3 = jnp.pad(a3, ((0, 0), (0, rows - rows0), (0, 0)))

    blk_shape = (1, blk, _LANES)
    out = pl.pallas_call(
        _blend_gather_kernel,
        out_shape=jax.ShapeDtypeStruct((B, rows, _LANES), a.dtype),
        grid_spec=pltpu.PrefetchScalarGridSpec(
            num_scalar_prefetch=2,                     # lam, perm -> SMEM
            grid=(B, n_chunks),
            in_specs=[
                # identity stream: block (b, c)
                pl.BlockSpec(blk_shape, lambda b, c, lam_r, perm_r: (b, c, 0)),
                # permuted stream: block (perm[b], c) -- gather happens in DMA
                pl.BlockSpec(blk_shape,
                             lambda b, c, lam_r, perm_r: (perm_r[b], c, 0)),
            ],
            out_specs=pl.BlockSpec(blk_shape,
                                   lambda b, c, lam_r, perm_r: (b, c, 0)),
        ),
        compiler_params=pltpu.CompilerParams(
            # Every output block is distinct -> both axes fully parallel
            # (v7x: both TensorCores get work even when B is small).
            dimension_semantics=("parallel", "parallel"),
            vmem_limit_bytes=_vmem_limit(blk * _LANES * itemsize)),
        cost_estimate=_cost(B * rows * _LANES, itemsize),
    )(lam, perm, a3, a3)

    out2 = out.reshape(B, rows * _LANES)
    if rows * _LANES != F:     # only when F % 128 != 0 or rows were padded
        out2 = out2[:, :F]
    return out2.reshape(a.shape)


def _blend_flat(a: jax.Array, lam: jax.Array, perm: jax.Array) -> jax.Array:
    """Small per-sample features: pre-gather with XLA, one flat row grid."""
    B = a.shape[0]
    a3, rows0, F = _to_lane_rows(a)
    ap3 = a3[perm]                                 # tiny tensor: cheap XLA gather
    itemsize = jnp.dtype(a.dtype).itemsize
    rows_cap = max(8, _MAX_BLOCK_BYTES // (_LANES * itemsize))

    total = B * rows0
    a2 = a3.reshape(total, _LANES)
    ap2 = ap3.reshape(total, _LANES)

    if total <= rows_cap:
        blk, n_blocks, padded = total, 1, total    # block == full dims
    else:
        n_blocks = _cdiv(total, rows_cap)
        blk = _round_up(_cdiv(total, n_blocks), 8)
        padded = n_blocks * blk
    if padded != total:
        a2 = jnp.pad(a2, ((0, padded - total), (0, 0)))
        ap2 = jnp.pad(ap2, ((0, padded - total), (0, 0)))

    blk_shape = (blk, _LANES)
    out = pl.pallas_call(
        _blend_flat_kernel,
        out_shape=jax.ShapeDtypeStruct((padded, _LANES), a.dtype),
        grid_spec=pltpu.PrefetchScalarGridSpec(
            num_scalar_prefetch=1,                 # lam -> SMEM
            grid=(n_blocks,),
            in_specs=[pl.BlockSpec(blk_shape, lambda r, lam_r: (r, 0)),
                      pl.BlockSpec(blk_shape, lambda r, lam_r: (r, 0))],
            out_specs=pl.BlockSpec(blk_shape, lambda r, lam_r: (r, 0)),
        ),
        compiler_params=pltpu.CompilerParams(
            dimension_semantics=("parallel",),
            vmem_limit_bytes=_vmem_limit(blk * _LANES * itemsize)),
        cost_estimate=_cost(padded * _LANES, itemsize),
    )(lam, a2, ap2)

    if padded != total:
        out = out[:total]
    out2 = out.reshape(B, rows0 * _LANES)
    if rows0 * _LANES != F:
        out2 = out2[:, :F]
    return out2.reshape(a.shape)


def _blend(a: jax.Array, lam: jax.Array, perm: jax.Array) -> jax.Array:
    F = int(np.prod(a.shape[1:])) if a.ndim > 1 else 1
    per_sample_bytes = F * jnp.dtype(a.dtype).itemsize
    if per_sample_bytes >= _GATHER_MIN_BYTES:
        return _blend_gather(a, lam, perm)
    return _blend_flat(a, lam, perm)


def mixup_apply(x: jax.Array, y: jax.Array,
                lam: jax.Array, perm: jax.Array):
    """x_mix = x*lam + x[perm]*(1-lam); y_mix = y*lam + y[perm]*(1-lam)."""
    lam = jnp.asarray(lam, jnp.float32).reshape(1)
    perm = perm.astype(jnp.int32)
    return _blend(x, lam, perm), _blend(y, lam, perm)


class MixupPallas:
    """JAX/Pallas port of the PyTorch Mixup module."""

    def __init__(self, alpha: float = 0.4, asymmetric: bool = False):
        self._alpha = float(alpha)
        self._asymmetric = asymmetric
        self._prev_lbd = -1.0
        self._prev_perm = None

    def sample_lambda(self, key: jax.Array) -> jax.Array:
        lam = jax.random.beta(key, self._alpha, self._alpha, dtype=jnp.float32)
        if self._asymmetric:
            lam = jnp.maximum(lam, 1.0 - lam)
        # TODO(synk): Python-side statefulness (prev_lambda) is not jit/vmap
        # safe; kept only to mirror the PyTorch module's API.
        self._prev_lbd = lam
        return lam

    def prev_lambda(self):
        return self._prev_lbd

    def __call__(self, key: jax.Array, x: jax.Array, y: jax.Array):
        if x.shape[0] != y.shape[0]:
            raise RuntimeError(
                f"Data to mix must have the same size along the first dim. "
                f"({x.shape[0]} != {y.shape[0]})")
        k_lam, k_perm = jax.random.split(key)
        lam = self.sample_lambda(k_lam)
        perm = jax.random.permutation(k_perm, x.shape[0]).astype(jnp.int32)
        self._prev_perm = perm
        return mixup_apply(x, y, lam, perm)


if __name__ == "__main__":
    key = jax.random.PRNGKey(0)
    kx1, kx2, ky, kmix1, kmix2 = jax.random.split(key, 5)

    B, NUM_CLASSES = 2, 10
    mixup = MixupPallas(alpha=0.4, asymmetric=False)

    y = jax.nn.one_hot(
        jax.random.randint(ky, (B,), 0, NUM_CLASSES), NUM_CLASSES
    ).astype(jnp.float32)

    # Case 1: small per-sample features -> flat (pre-gather) path.
    x1 = jax.random.normal(kx1, (B, 4, 16, 16), dtype=jnp.float32)
    xm1, ym1 = mixup(kmix1, x1, y)
    jax.block_until_ready((xm1, ym1))
    lam1 = jnp.asarray(mixup.prev_lambda(), jnp.float32)
    perm1 = mixup._prev_perm
    np.testing.assert_allclose(np.asarray(xm1),
                               np.asarray(x1 * lam1 + x1[perm1] * (1.0 - lam1)),
                               rtol=1e-6, atol=1e-6)
    np.testing.assert_allclose(np.asarray(ym1),
                               np.asarray(y * lam1 + y[perm1] * (1.0 - lam1)),
                               rtol=1e-6, atol=1e-6)

    # Case 2: larger per-sample features -> DMA-gather path (perm via index_map).
    x2 = jax.random.normal(kx2, (B, 4, 128, 128), dtype=jnp.float32)
    xm2, ym2 = mixup(kmix2, x2, y)
    jax.block_until_ready((xm2, ym2))
    lam2 = jnp.asarray(mixup.prev_lambda(), jnp.float32)
    perm2 = mixup._prev_perm
    np.testing.assert_allclose(np.asarray(xm2),
                               np.asarray(x2 * lam2 + x2[perm2] * (1.0 - lam2)),
                               rtol=1e-6, atol=1e-6)
    np.testing.assert_allclose(np.asarray(ym2),
                               np.asarray(y * lam2 + y[perm2] * (1.0 - lam2)),
                               rtol=1e-6, atol=1e-6)

    print("KERNEL_OK")
</pallas_src>

<mosaic_0001>
module attributes {stable_mosaic.version = 11 : i64} {
  func.func @_blend_flat_kernel(%arg0: i32, %arg1: memref<1xf32, #tpu.memory_space<smem>>, %arg2: memref<16x128xf32, #tpu.memory_space<vmem>>, %arg3: memref<16x128xf32, #tpu.memory_space<vmem>>, %arg4: memref<16x128xf32, #tpu.memory_space<vmem>>) attributes {dimension_semantics = [#tpu.dimension_semantics<parallel>], iteration_bounds = array<i64: 1>, scalar_prefetch = 1 : i64, scratch_operands = 0 : i64, tpu.core_type = #tpu.core_type<tc>, window_params = [{transform_indices = @transform_0, window_bounds = array<i64: 16, 128>}, {transform_indices = @transform_1, window_bounds = array<i64: 16, 128>}, {transform_indices = @transform_2, window_bounds = array<i64: 16, 128>}]} {
    %c0 = arith.constant 0 : index
    %0 = memref.load %arg1[%c0] : memref<1xf32, #tpu.memory_space<smem>>
    %c0_0 = arith.constant 0 : index
    %c0_1 = arith.constant 0 : index
    %1 = vector.load %arg2[%c0_0, %c0_1] : memref<16x128xf32, #tpu.memory_space<vmem>>, vector<16x128xf32>
    %2 = vector.broadcast %0 : f32 to vector<16x128xf32>
    %3 = arith.mulf %1, %2 : vector<16x128xf32>
    %c0_2 = arith.constant 0 : index
    %c0_3 = arith.constant 0 : index
    %4 = vector.load %arg3[%c0_2, %c0_3] : memref<16x128xf32, #tpu.memory_space<vmem>>, vector<16x128xf32>
    %cst = arith.constant 1.000000e+00 : f32
    %5 = arith.subf %cst, %0 : f32
    %6 = vector.broadcast %5 : f32 to vector<16x128xf32>
    %7 = arith.mulf %4, %6 : vector<16x128xf32>
    %8 = arith.addf %3, %7 : vector<16x128xf32>
    %c0_4 = arith.constant 0 : index
    %c0_5 = arith.constant 0 : index
    %9 = vector.load %arg4[%c0_4, %c0_5] : memref<16x128xf32, #tpu.memory_space<vmem>>, vector<16x128xf32>
    tpu.vector_store %arg4[%c0_4, %c0_5], %8 {strides = array<i32>} : memref<16x128xf32, #tpu.memory_space<vmem>>, vector<16x128xf32>,
    return
  }
  func.func @transform_0(%arg0: i32, %arg1: memref<1xf32, #tpu.memory_space<smem>>) -> (i32, i32) {
    %c0_i32 = arith.constant 0 : i32
    %c0_i32_0 = arith.constant 0 : i32
    return %arg0, %c0_i32 : i32, i32
  }
  func.func @transform_1(%arg0: i32, %arg1: memref<1xf32, #tpu.memory_space<smem>>) -> (i32, i32) {
    %c0_i32 = arith.constant 0 : i32
    %c0_i32_0 = arith.constant 0 : i32
    return %arg0, %c0_i32 : i32, i32
  }
  func.func @transform_2(%arg0: i32, %arg1: memref<1xf32, #tpu.memory_space<smem>>) -> (i32, i32) {
    %c0_i32 = arith.constant 0 : i32
    %c0_i32_0 = arith.constant 0 : i32
    return %arg0, %c0_i32 : i32, i32
  }
}

</mosaic_0001>

<llo_original>
// kernel: tpu_custom_call.1
$region0: #{tpu_custom_call.1}
  #allocation0 [shape = 'u32[]', space=smem, size = 0x4, offset = 0x4, fixed_abs, tag = 'smem constant byte address 0x4 - core index']
  #allocation1 [shape = 'u32[144,128]{1,0:T(1,128)}', space=vmem, size = 0x12000, scoped, tag = 'internal scratch']
  #allocation2 [shape = 's32[1]{0}', space=sflag, size = 0x4, scoped, tag = 'scoped memory for tpu_custom_call.1']
  #allocation3 [shape = 'f32[1]{0:T(128)S(6)}', space=smem, size = 0x200, scoped, tag = 'prefetched SMEM operand 0']
  %s0 = inlined_call_operand.<no memory space> [shape: f32[1], index: 0, kind: input, shape index: {}]
  %s1 = inlined_call_operand.hbm [shape: f32[16,128], index: 1, kind: input, shape index: {}]
  %s2 = inlined_call_operand.hbm [shape: f32[16,128], index: 2, kind: input, shape index: {}]
  %s3 = inlined_call_operand.hbm [shape: f32[16,128], index: 3, kind: output, shape index: {}]
  %s4 = sld [smem:[#allocation0]]
  $region26: #{tpu_custom_call.1} parent=0
    _
  %s6 = ssub.s32 1, %s4
  %s7 = scalar_select 0, %s6, %s4
  %8 = sst [smem:[#allocation3]] %s0
  $region1: #{tpu_custom_call.1} parent=0
    #allocation4 [shape = 'u8[8192]{0}', space=vmem, size = 0x2000, scoped, tag = 'input window, operand 1, single buffered']
    #allocation5 [shape = 's32[1]{0}', space=sflag, size = 0x4, scoped, tag = 'scoped memory for tpu_custom_call.1']
    #allocation6 [shape = 's32[1]{0}', space=sflag, size = 0x4, scoped, tag = 'scoped memory for tpu_custom_call.1']
    #allocation7 [shape = 'u8[8192]{0}', space=vmem, size = 0x2000, scoped, tag = 'input window, operand 2, single buffered']
    #allocation8 [shape = 's32[1]{0}', space=sflag, size = 0x4, scoped, tag = 'scoped memory for tpu_custom_call.1']
    #allocation9 [shape = 'u8[8192]{0}', space=vmem, size = 0x2000, scoped, tag = 'output window, operand 0, single buffered']
    %9 = vsyncpa [#allocation5], 0
    %10 = vsyncpa [#allocation8], 0
    %11 = vsyncpa [#allocation6], 0
    // Predicated region
    $region2: #{tpu_custom_call.1} parent=1 // pred_check
      _
    $region3: #{tpu_custom_call.1} parent=1 // pred_check_branch
      %13 = sbr.rel (0) target = $region5
    $region4: #{tpu_custom_call.1} parent=1 // pred_region
      %s15 = ssub.s32 256, 256
      %16 = vsyncadd [#allocation5], %s15
      %s17 = sshll.u32 [#allocation4], 4
      %s18 = int_to_ptr.vmem [resolvable:$true] %s17
      %23 = dma.hbm_to_vmem [thread:$0]  %s1, 256, %s18, [#allocation5], 128, 128, 8
    $region5: #{tpu_custom_call.1} parent=1 // pred_fallthru
      _
    // Predicated region
    $region6: #{tpu_custom_call.1} parent=1 // pred_check
      _
    $region7: #{tpu_custom_call.1} parent=1 // pred_check_branch
      %25 = sbr.rel (0) target = $region9
    $region8: #{tpu_custom_call.1} parent=1 // pred_region
      %s27 = ssub.s32 256, 256
      %28 = vsyncadd [#allocation8], %s27
      %s29 = sshll.u32 [#allocation7], 4
      %s30 = int_to_ptr.vmem [resolvable:$true] %s29
      %35 = dma.hbm_to_vmem [thread:$0]  %s2, 256, %s30, [#allocation8], 128, 128, 8
    $region9: #{tpu_custom_call.1} parent=1 // pred_fallthru
      _
    // Predicated region
    $region10: #{tpu_custom_call.1} parent=1 // pred_check
      _
    $region11: #{tpu_custom_call.1} parent=1 // pred_check_branch
      %37 = sbr.rel (0) target = $region13
    $region12: #{tpu_custom_call.1} parent=1 // pred_region
      %38 = dma.done [#allocation5], 256
    $region13: #{tpu_custom_call.1} parent=1 // pred_fallthru
      _
    // Predicated region
    $region14: #{tpu_custom_call.1} parent=1 // pred_check
      _
    $region15: #{tpu_custom_call.1} parent=1 // pred_check_branch
      %40 = sbr.rel (0) target = $region17
    $region16: #{tpu_custom_call.1} parent=1 // pred_region
      %41 = dma.done [#allocation8], 256
    $region17: #{tpu_custom_call.1} parent=1 // pred_fallthru
      _
    %s42 = sld [smem:[#allocation3]]
    %v43 = vld [vmem:[#allocation4] sm:$0xff]
    %v44 = vld [vmem:[#allocation4 + $0x8] sm:$0xff]
    %v45 = vstv %s42
    %v46 = vmul.f32 %v43, %v45
    %v47 = vmul.f32 %v44, %v45
    %v48 = vld [vmem:[#allocation7] sm:$0xff]
    %v49 = vld [vmem:[#allocation7 + $0x8] sm:$0xff]
    %s50 = ssub.f32 1.0, %s42
    %v51 = vstv %s50
    %v52 = vmul.f32 %v48, %v51
    %v53 = vmul.f32 %v49, %v51
    %v54 = vadd.f32 %v46, %v52
    %v55 = vadd.f32 %v47, %v53
    %56 = vst [vmem:[#allocation9] sm:$0xff] %v54
    %57 = vst [vmem:[#allocation9 + $0x8] sm:$0xff] %v55
    // Predicated region
    $region18: #{tpu_custom_call.1} parent=1 // pred_check
      _
    $region19: #{tpu_custom_call.1} parent=1 // pred_check_branch
      %59 = sbr.rel (0) target = $region21
    $region20: #{tpu_custom_call.1} parent=1 // pred_region
      %s61 = ssub.s32 256, 256
      %62 = vsyncadd [#allocation6], %s61
      %s63 = sshll.u32 [#allocation9], 4
      %s64 = int_to_ptr.vmem [resolvable:$true] %s63
      %69 = dma.vmem_to_hbm [thread:$0]  %s64, 256, %s3, [#allocation6], 128, 128, 8
    $region21: #{tpu_custom_call.1} parent=1 // pred_fallthru
      _
    // Predicated region
    $region22: #{tpu_custom_call.1} parent=1 // pred_check
      _
    $region23: #{tpu_custom_call.1} parent=1 // pred_check_branch
      %71 = sbr.rel (0) target = $region25
    $region24: #{tpu_custom_call.1} parent=1 // pred_region
      %72 = dma.done [#allocation6], 256
    $region25: #{tpu_custom_call.1} parent=1 // pred_fallthru
      _
    %73 = vsyncpa [#allocation5], 1
    %74 = vsyncpa [#allocation8], 1
    %75 = vsyncpa [#allocation6], 1

</llo_original>
